<compile_context>
chip_gen: v7x
topology: tpu7x:2x2x1
jax: 0.10.0
libtpu: 0.0.40
codegen_flags: <defaults>
</compile_context>

<pallas_src>
import functools
import math

import jax
import jax.numpy as jnp
from jax import lax
from jax.experimental import pallas as pl
from jax.experimental.pallas import tpu as pltpu


def _fused_self_attention_kernel(x_ref, w_ref, b_ref, mask_ref,
                                 ctx_ref, probs_ref, *, num_heads):
    # x_ref:     (1, S, H)      hidden states of the current batch element
    # w_ref:     (H, 3H)        fused in-major QKV weight (cols: [q | k | v])
    # b_ref:     (1, 3H)        fused QKV bias
    # mask_ref:  (1, S, S)      additive attention mask (pre-broadcast)
    # ctx_ref:   (1, S, H)      context output (heads already merged, lane-dense)
    # probs_ref: (1, nh, S, S)  softmax probabilities per head
    S = x_ref.shape[1]
    H = x_ref.shape[2]
    d = H // num_heads
    scale = jnp.float32(1.0 / math.sqrt(d))

    x = x_ref[0]                                   # (S, H), native dtype -> MXU
    # One fused projection for all heads: (S, H) @ (H, 3H) -> (S, 3H) in f32.
    qkv = jnp.dot(x, w_ref[...], preferred_element_type=jnp.float32)
    qkv = qkv + b_ref[...].astype(jnp.float32)     # broadcast (1, 3H) bias add
    mask = mask_ref[0].astype(jnp.float32)         # (S, S)

    dn_tt = (((1,), (1,)), ((), ()))               # contract minor axes: q @ k^T
    for h in range(num_heads):
        lo = h * d
        q_h = qkv[:, lo:lo + d] * scale                      # fold 1/sqrt(d) into q
        k_h = qkv[:, H + lo:H + lo + d]
        v_h = qkv[:, 2 * H + lo:2 * H + lo + d]

        scores = lax.dot_general(q_h, k_h, dn_tt,
                                 preferred_element_type=jnp.float32)
        scores = scores + mask                                # (S, S)

        # numerically stable softmax along the key axis (f32, in VMEM)
        m = jnp.max(scores, axis=-1, keepdims=True)
        e = jnp.exp(scores - m)
        denom = jnp.sum(e, axis=-1, keepdims=True)
        probs = e * pl.reciprocal(denom)                      # exact EUP recip + mul

        ctx = jnp.dot(probs, v_h, preferred_element_type=jnp.float32)  # (S, d)

        ctx_ref[0, :, lo:lo + d] = ctx.astype(ctx_ref.dtype)
        probs_ref[0, h] = probs.astype(probs_ref.dtype)


def bert_self_attention(hidden_states, q_weight, q_bias, k_weight, k_bias,
                        v_weight, v_bias, attention_mask, num_attention_heads):
    """hidden_states: [B, S, H]; weights: [H, H] (PyTorch nn.Linear out x in);
    biases: [H]; attention_mask: additive, broadcastable to [B, 1, S, S]."""
    B, S, H = hidden_states.shape
    nh = num_attention_heads
    assert H % nh == 0

    # One-time wrapper prep: fused in-major QKV weight (H_in, 3H_out) and bias.
    w_qkv = jnp.concatenate([q_weight.T, k_weight.T, v_weight.T], axis=1)   # (H, 3H)
    b_qkv = jnp.concatenate([q_bias, k_bias, v_bias], axis=0).reshape(1, 3 * H)

    # Pre-broadcast the additive mask to a per-batch (S, S) slab.
    mask = jnp.broadcast_to(attention_mask, (B, 1, S, S)).reshape(B, S, S)
    mask = mask.astype(jnp.float32)

    out_dtype = hidden_states.dtype
    kernel = functools.partial(_fused_self_attention_kernel, num_heads=nh)

    context, probs = pl.pallas_call(
        kernel,
        out_shape=(
            jax.ShapeDtypeStruct((B, S, H), out_dtype),
            jax.ShapeDtypeStruct((B, nh, S, S), jnp.float32),
        ),
        grid_spec=pltpu.PrefetchScalarGridSpec(
            num_scalar_prefetch=0,
            grid=(B,),
            in_specs=[
                pl.BlockSpec((1, S, H), lambda b: (b, 0, 0)),      # x of batch b
                pl.BlockSpec((H, 3 * H), lambda b: (0, 0)),        # fused W (resident)
                pl.BlockSpec((1, 3 * H), lambda b: (0, 0)),        # fused bias (resident)
                pl.BlockSpec((1, S, S), lambda b: (b, 0, 0)),      # additive mask
            ],
            out_specs=[
                pl.BlockSpec((1, S, H), lambda b: (b, 0, 0)),          # context (lane-dense)
                pl.BlockSpec((1, nh, S, S), lambda b: (b, 0, 0, 0)),   # softmax probs
            ],
        ),
        compiler_params=pltpu.CompilerParams(
            dimension_semantics=("parallel",)),
    )(hidden_states, w_qkv, b_qkv, mask)

    return context, probs


def _reference(hidden_states, q_weight, q_bias, k_weight, k_bias, v_weight,
               v_bias, attention_mask, num_attention_heads):
    B, S, H = hidden_states.shape
    nh = num_attention_heads
    d = H // nh
    prec = lax.Precision.HIGHEST

    def project(w, b):
        y = jnp.einsum("bsh,oh->bso", hidden_states, w, precision=prec) + b
        return y.reshape(B, S, nh, d).transpose(0, 2, 1, 3)          # (B, nh, S, d)

    q = project(q_weight, q_bias)
    k = project(k_weight, k_bias)
    v = project(v_weight, v_bias)

    scores = jnp.einsum("bhqd,bhkd->bhqk", q, k, precision=prec) / math.sqrt(d)
    scores = scores + attention_mask
    probs = jax.nn.softmax(scores, axis=-1)
    ctx = jnp.einsum("bhqk,bhkd->bhqd", probs, v, precision=prec)
    ctx = ctx.transpose(0, 2, 1, 3).reshape(B, S, H)
    return ctx, probs


if __name__ == "__main__":
    key = jax.random.PRNGKey(0)
    B, S, H, NH = 2, 8, 32, 4

    ks = jax.random.split(key, 7)
    hidden_states = jax.random.normal(ks[0], (B, S, H), dtype=jnp.float32)
    wscale = 1.0 / math.sqrt(H)
    q_weight = jax.random.normal(ks[1], (H, H), dtype=jnp.float32) * wscale
    k_weight = jax.random.normal(ks[2], (H, H), dtype=jnp.float32) * wscale
    v_weight = jax.random.normal(ks[3], (H, H), dtype=jnp.float32) * wscale
    q_bias = jax.random.normal(ks[4], (H,), dtype=jnp.float32) * 0.02
    k_bias = jax.random.normal(ks[5], (H,), dtype=jnp.float32) * 0.02
    v_bias = jax.random.normal(ks[6], (H,), dtype=jnp.float32) * 0.02

    # BERT-style extended additive mask: 0 for valid tokens, -10000 for padded keys.
    valid = jnp.ones((B, S), dtype=jnp.float32).at[1, 6:].set(0.0)
    attention_mask = (1.0 - valid)[:, None, None, :] * -10000.0      # (B, 1, 1, S)

    context, probs = bert_self_attention(hidden_states, q_weight, q_bias,
                                         k_weight, k_bias, v_weight, v_bias,
                                         attention_mask, NH)
    context = jax.block_until_ready(context)
    probs = jax.block_until_ready(probs)

    ref_ctx, ref_probs = _reference(hidden_states, q_weight, q_bias, k_weight,
                                    k_bias, v_weight, v_bias, attention_mask, NH)

    assert context.shape == (B, S, H)
    assert probs.shape == (B, NH, S, S)
    assert jnp.allclose(context, ref_ctx, atol=1e-4, rtol=1e-4), "context mismatch vs reference"
    assert jnp.allclose(probs, ref_probs, atol=1e-4, rtol=1e-4), "probs mismatch vs reference"

    print("KERNEL_OK")
</pallas_src>

<mosaic_0001>
module attributes {stable_mosaic.version = 11 : i64} {
  func.func @_fused_self_attention_kernel(%arg0: i32, %arg1: memref<1x8x32xf32, #tpu.memory_space<vmem>>, %arg2: memref<32x96xf32, #tpu.memory_space<vmem>>, %arg3: memref<1x96xf32, #tpu.memory_space<vmem>>, %arg4: memref<1x8x8xf32, #tpu.memory_space<vmem>>, %arg5: memref<1x8x32xf32, #tpu.memory_space<vmem>>, %arg6: memref<1x4x8x8xf32, #tpu.memory_space<vmem>>) attributes {dimension_semantics = [#tpu.dimension_semantics<parallel>], iteration_bounds = array<i64: 2>, scalar_prefetch = 0 : i64, scratch_operands = 0 : i64, tpu.core_type = #tpu.core_type<tc>, window_params = [{transform_indices = @transform_0, window_bounds = array<i64: 1, 8, 32>}, {pipeline_mode = #tpu.pipeline_mode<synchronous>, transform_indices = @transform_1, window_bounds = array<i64: 32, 96>}, {pipeline_mode = #tpu.pipeline_mode<synchronous>, transform_indices = @transform_2, window_bounds = array<i64: 1, 96>}, {transform_indices = @transform_3, window_bounds = array<i64: 1, 8, 8>}, {transform_indices = @transform_4, window_bounds = array<i64: 1, 8, 32>}, {transform_indices = @transform_5, window_bounds = array<i64: 1, 4, 8, 8>}]} {
    %c0 = arith.constant 0 : index
    %c0_0 = arith.constant 0 : index
    %c0_1 = arith.constant 0 : index
    %0 = vector.load %arg1[%c0, %c0_0, %c0_1] : memref<1x8x32xf32, #tpu.memory_space<vmem>>, vector<1x8x32xf32>
    %1 = vector.shape_cast %0 : vector<1x8x32xf32> to vector<8x32xf32>
    %c0_2 = arith.constant 0 : index
    %c0_3 = arith.constant 0 : index
    %2 = vector.load %arg2[%c0_2, %c0_3] : memref<32x96xf32, #tpu.memory_space<vmem>>, vector<32x96xf32>
    %cst = arith.constant dense<0.000000e+00> : vector<8x96xf32>
    %3 = tpu.matmul %1, %2, %cst {dimension_numbers = #tpu.dot_dimension_numbers<[1], [0], [0], [1], [0, 0, 1, 1], [], []>} : vector<8x32xf32>, vector<32x96xf32>, vector<8x96xf32> -> vector<8x96xf32>
    %c0_4 = arith.constant 0 : index
    %c0_5 = arith.constant 0 : index
    %4 = vector.load %arg3[%c0_4, %c0_5] : memref<1x96xf32, #tpu.memory_space<vmem>>, vector<1x96xf32>
    %5 = vector.broadcast %4 : vector<1x96xf32> to vector<8x96xf32>
    %6 = arith.addf %3, %5 : vector<8x96xf32>
    %c0_6 = arith.constant 0 : index
    %c0_7 = arith.constant 0 : index
    %c0_8 = arith.constant 0 : index
    %7 = vector.load %arg4[%c0_6, %c0_7, %c0_8] : memref<1x8x8xf32, #tpu.memory_space<vmem>>, vector<1x8x8xf32>
    %8 = vector.shape_cast %7 : vector<1x8x8xf32> to vector<8x8xf32>
    %9 = vector.extract_strided_slice %6 {offsets = [0, 0], sizes = [8, 8], strides = [1, 1]} : vector<8x96xf32> to vector<8x8xf32>
    %cst_9 = arith.constant 0.353553385 : f32
    %10 = vector.broadcast %cst_9 : f32 to vector<8x8xf32>
    %11 = arith.mulf %9, %10 : vector<8x8xf32>
    %12 = vector.extract_strided_slice %6 {offsets = [0, 32], sizes = [8, 8], strides = [1, 1]} : vector<8x96xf32> to vector<8x8xf32>
    %13 = vector.extract_strided_slice %6 {offsets = [0, 64], sizes = [8, 8], strides = [1, 1]} : vector<8x96xf32> to vector<8x8xf32>
    %cst_10 = arith.constant dense<0.000000e+00> : vector<8x8xf32>
    %14 = tpu.matmul %11, %12, %cst_10 {dimension_numbers = #tpu.dot_dimension_numbers<[1], [1], [0], [0], [0, 0, 1, 0], [], []>} : vector<8x8xf32>, vector<8x8xf32>, vector<8x8xf32> -> vector<8x8xf32>
    %15 = arith.addf %14, %8 : vector<8x8xf32>
    %cst_11 = arith.constant dense<0xFF800000> : vector<8xf32>
    %16 = vector.multi_reduction <maximumf>, %15, %cst_11 [1] : vector<8x8xf32> to vector<8xf32>
    %17 = vector.shape_cast %16 : vector<8xf32> to vector<8x1xf32>
    %18 = vector.broadcast %17 : vector<8x1xf32> to vector<8x8xf32>
    %19 = arith.subf %15, %18 : vector<8x8xf32>
    %20 = math.exp %19 : vector<8x8xf32>
    %cst_12 = arith.constant dense<0.000000e+00> : vector<8xf32>
    %21 = vector.multi_reduction <add>, %20, %cst_12 [1] : vector<8x8xf32> to vector<8xf32>
    %22 = vector.shape_cast %21 : vector<8xf32> to vector<8x1xf32>
    %23 = tpu.reciprocal %22 : vector<8x1xf32> -> vector<8x1xf32>
    %24 = vector.broadcast %23 : vector<8x1xf32> to vector<8x8xf32>
    %25 = arith.mulf %20, %24 : vector<8x8xf32>
    %cst_13 = arith.constant dense<0.000000e+00> : vector<8x8xf32>
    %26 = tpu.matmul %25, %13, %cst_13 {dimension_numbers = #tpu.dot_dimension_numbers<[1], [0], [0], [1], [0, 0, 1, 1], [], []>} : vector<8x8xf32>, vector<8x8xf32>, vector<8x8xf32> -> vector<8x8xf32>
    %c0_14 = arith.constant 0 : index
    %c0_15 = arith.constant 0 : index
    %c0_16 = arith.constant 0 : index
    %27 = vector.load %arg5[%c0_14, %c0_15, %c0_16] : memref<1x8x32xf32, #tpu.memory_space<vmem>>, vector<1x8x8xf32>
    %28 = vector.shape_cast %27 : vector<1x8x8xf32> to vector<8x8xf32>
    %29 = vector.shape_cast %26 : vector<8x8xf32> to vector<1x8x8xf32>
    tpu.vector_store %arg5[%c0_14, %c0_15, %c0_16], %29 {strides = array<i32>} : memref<1x8x32xf32, #tpu.memory_space<vmem>>, vector<1x8x8xf32>,
    %c0_17 = arith.constant 0 : index
    %c0_18 = arith.constant 0 : index
    %c0_19 = arith.constant 0 : index
    %c0_20 = arith.constant 0 : index
    %30 = vector.load %arg6[%c0_17, %c0_18, %c0_19, %c0_20] : memref<1x4x8x8xf32, #tpu.memory_space<vmem>>, vector<1x1x8x8xf32>
    %31 = vector.shape_cast %30 : vector<1x1x8x8xf32> to vector<8x8xf32>
    %32 = vector.shape_cast %25 : vector<8x8xf32> to vector<1x1x8x8xf32>
    tpu.vector_store %arg6[%c0_17, %c0_18, %c0_19, %c0_20], %32 {strides = array<i32>} : memref<1x4x8x8xf32, #tpu.memory_space<vmem>>, vector<1x1x8x8xf32>,
    %33 = vector.extract_strided_slice %6 {offsets = [0, 8], sizes = [8, 8], strides = [1, 1]} : vector<8x96xf32> to vector<8x8xf32>
    %cst_21 = arith.constant 0.353553385 : f32
    %34 = vector.broadcast %cst_21 : f32 to vector<8x8xf32>
    %35 = arith.mulf %33, %34 : vector<8x8xf32>
    %36 = vector.extract_strided_slice %6 {offsets = [0, 40], sizes = [8, 8], strides = [1, 1]} : vector<8x96xf32> to vector<8x8xf32>
    %37 = vector.extract_strided_slice %6 {offsets = [0, 72], sizes = [8, 8], strides = [1, 1]} : vector<8x96xf32> to vector<8x8xf32>
    %cst_22 = arith.constant dense<0.000000e+00> : vector<8x8xf32>
    %38 = tpu.matmul %35, %36, %cst_22 {dimension_numbers = #tpu.dot_dimension_numbers<[1], [1], [0], [0], [0, 0, 1, 0], [], []>} : vector<8x8xf32>, vector<8x8xf32>, vector<8x8xf32> -> vector<8x8xf32>
    %39 = arith.addf %38, %8 : vector<8x8xf32>
    %cst_23 = arith.constant dense<0xFF800000> : vector<8xf32>
    %40 = vector.multi_reduction <maximumf>, %39, %cst_23 [1] : vector<8x8xf32> to vector<8xf32>
    %41 = vector.shape_cast %40 : vector<8xf32> to vector<8x1xf32>
    %42 = vector.broadcast %41 : vector<8x1xf32> to vector<8x8xf32>
    %43 = arith.subf %39, %42 : vector<8x8xf32>
    %44 = math.exp %43 : vector<8x8xf32>
    %cst_24 = arith.constant dense<0.000000e+00> : vector<8xf32>
    %45 = vector.multi_reduction <add>, %44, %cst_24 [1] : vector<8x8xf32> to vector<8xf32>
    %46 = vector.shape_cast %45 : vector<8xf32> to vector<8x1xf32>
    %47 = tpu.reciprocal %46 : vector<8x1xf32> -> vector<8x1xf32>
    %48 = vector.broadcast %47 : vector<8x1xf32> to vector<8x8xf32>
    %49 = arith.mulf %44, %48 : vector<8x8xf32>
    %cst_25 = arith.constant dense<0.000000e+00> : vector<8x8xf32>
    %50 = tpu.matmul %49, %37, %cst_25 {dimension_numbers = #tpu.dot_dimension_numbers<[1], [0], [0], [1], [0, 0, 1, 1], [], []>} : vector<8x8xf32>, vector<8x8xf32>, vector<8x8xf32> -> vector<8x8xf32>
    %c0_26 = arith.constant 0 : index
    %c0_27 = arith.constant 0 : index
    %c8 = arith.constant 8 : index
    %51 = vector.load %arg5[%c0_26, %c0_27, %c8] : memref<1x8x32xf32, #tpu.memory_space<vmem>>, vector<1x8x8xf32>
    %52 = vector.shape_cast %51 : vector<1x8x8xf32> to vector<8x8xf32>
    %53 = vector.shape_cast %50 : vector<8x8xf32> to vector<1x8x8xf32>
    tpu.vector_store %arg5[%c0_26, %c0_27, %c8], %53 {strides = array<i32>} : memref<1x8x32xf32, #tpu.memory_space<vmem>>, vector<1x8x8xf32>,
    %c0_28 = arith.constant 0 : index
    %c1 = arith.constant 1 : index
    %c0_29 = arith.constant 0 : index
    %c0_30 = arith.constant 0 : index
    %54 = vector.load %arg6[%c0_28, %c1, %c0_29, %c0_30] : memref<1x4x8x8xf32, #tpu.memory_space<vmem>>, vector<1x1x8x8xf32>
    %55 = vector.shape_cast %54 : vector<1x1x8x8xf32> to vector<8x8xf32>
    %56 = vector.shape_cast %49 : vector<8x8xf32> to vector<1x1x8x8xf32>
    tpu.vector_store %arg6[%c0_28, %c1, %c0_29, %c0_30], %56 {strides = array<i32>} : memref<1x4x8x8xf32, #tpu.memory_space<vmem>>, vector<1x1x8x8xf32>,
    %57 = vector.extract_strided_slice %6 {offsets = [0, 16], sizes = [8, 8], strides = [1, 1]} : vector<8x96xf32> to vector<8x8xf32>
    %cst_31 = arith.constant 0.353553385 : f32
    %58 = vector.broadcast %cst_31 : f32 to vector<8x8xf32>
    %59 = arith.mulf %57, %58 : vector<8x8xf32>
    %60 = vector.extract_strided_slice %6 {offsets = [0, 48], sizes = [8, 8], strides = [1, 1]} : vector<8x96xf32> to vector<8x8xf32>
    %61 = vector.extract_strided_slice %6 {offsets = [0, 80], sizes = [8, 8], strides = [1, 1]} : vector<8x96xf32> to vector<8x8xf32>
    %cst_32 = arith.constant dense<0.000000e+00> : vector<8x8xf32>
    %62 = tpu.matmul %59, %60, %cst_32 {dimension_numbers = #tpu.dot_dimension_numbers<[1], [1], [0], [0], [0, 0, 1, 0], [], []>} : vector<8x8xf32>, vector<8x8xf32>, vector<8x8xf32> -> vector<8x8xf32>
    %63 = arith.addf %62, %8 : vector<8x8xf32>
    %cst_33 = arith.constant dense<0xFF800000> : vector<8xf32>
    %64 = vector.multi_reduction <maximumf>, %63, %cst_33 [1] : vector<8x8xf32> to vector<8xf32>
    %65 = vector.shape_cast %64 : vector<8xf32> to vector<8x1xf32>
    %66 = vector.broadcast %65 : vector<8x1xf32> to vector<8x8xf32>
    %67 = arith.subf %63, %66 : vector<8x8xf32>
    %68 = math.exp %67 : vector<8x8xf32>
    %cst_34 = arith.constant dense<0.000000e+00> : vector<8xf32>
    %69 = vector.multi_reduction <add>, %68, %cst_34 [1] : vector<8x8xf32> to vector<8xf32>
    %70 = vector.shape_cast %69 : vector<8xf32> to vector<8x1xf32>
    %71 = tpu.reciprocal %70 : vector<8x1xf32> -> vector<8x1xf32>
    %72 = vector.broadcast %71 : vector<8x1xf32> to vector<8x8xf32>
    %73 = arith.mulf %68, %72 : vector<8x8xf32>
    %cst_35 = arith.constant dense<0.000000e+00> : vector<8x8xf32>
    %74 = tpu.matmul %73, %61, %cst_35 {dimension_numbers = #tpu.dot_dimension_numbers<[1], [0], [0], [1], [0, 0, 1, 1], [], []>} : vector<8x8xf32>, vector<8x8xf32>, vector<8x8xf32> -> vector<8x8xf32>
    %c0_36 = arith.constant 0 : index
    %c0_37 = arith.constant 0 : index
    %c16 = arith.constant 16 : index
    %75 = vector.load %arg5[%c0_36, %c0_37, %c16] : memref<1x8x32xf32, #tpu.memory_space<vmem>>, vector<1x8x8xf32>
    %76 = vector.shape_cast %75 : vector<1x8x8xf32> to vector<8x8xf32>
    %77 = vector.shape_cast %74 : vector<8x8xf32> to vector<1x8x8xf32>
    tpu.vector_store %arg5[%c0_36, %c0_37, %c16], %77 {strides = array<i32>} : memref<1x8x32xf32, #tpu.memory_space<vmem>>, vector<1x8x8xf32>,
    %c0_38 = arith.constant 0 : index
    %c2 = arith.constant 2 : index
    %c0_39 = arith.constant 0 : index
    %c0_40 = arith.constant 0 : index
    %78 = vector.load %arg6[%c0_38, %c2, %c0_39, %c0_40] : memref<1x4x8x8xf32, #tpu.memory_space<vmem>>, vector<1x1x8x8xf32>
    %79 = vector.shape_cast %78 : vector<1x1x8x8xf32> to vector<8x8xf32>
    %80 = vector.shape_cast %73 : vector<8x8xf32> to vector<1x1x8x8xf32>
    tpu.vector_store %arg6[%c0_38, %c2, %c0_39, %c0_40], %80 {strides = array<i32>} : memref<1x4x8x8xf32, #tpu.memory_space<vmem>>, vector<1x1x8x8xf32>,
    %81 = vector.extract_strided_slice %6 {offsets = [0, 24], sizes = [8, 8], strides = [1, 1]} : vector<8x96xf32> to vector<8x8xf32>
    %cst_41 = arith.constant 0.353553385 : f32
    %82 = vector.broadcast %cst_41 : f32 to vector<8x8xf32>
    %83 = arith.mulf %81, %82 : vector<8x8xf32>
    %84 = vector.extract_strided_slice %6 {offsets = [0, 56], sizes = [8, 8], strides = [1, 1]} : vector<8x96xf32> to vector<8x8xf32>
    %85 = vector.extract_strided_slice %6 {offsets = [0, 88], sizes = [8, 8], strides = [1, 1]} : vector<8x96xf32> to vector<8x8xf32>
    %cst_42 = arith.constant dense<0.000000e+00> : vector<8x8xf32>
    %86 = tpu.matmul %83, %84, %cst_42 {dimension_numbers = #tpu.dot_dimension_numbers<[1], [1], [0], [0], [0, 0, 1, 0], [], []>} : vector<8x8xf32>, vector<8x8xf32>, vector<8x8xf32> -> vector<8x8xf32>
    %87 = arith.addf %86, %8 : vector<8x8xf32>
    %cst_43 = arith.constant dense<0xFF800000> : vector<8xf32>
    %88 = vector.multi_reduction <maximumf>, %87, %cst_43 [1] : vector<8x8xf32> to vector<8xf32>
    %89 = vector.shape_cast %88 : vector<8xf32> to vector<8x1xf32>
    %90 = vector.broadcast %89 : vector<8x1xf32> to vector<8x8xf32>
    %91 = arith.subf %87, %90 : vector<8x8xf32>
    %92 = math.exp %91 : vector<8x8xf32>
    %cst_44 = arith.constant dense<0.000000e+00> : vector<8xf32>
    %93 = vector.multi_reduction <add>, %92, %cst_44 [1] : vector<8x8xf32> to vector<8xf32>
    %94 = vector.shape_cast %93 : vector<8xf32> to vector<8x1xf32>
    %95 = tpu.reciprocal %94 : vector<8x1xf32> -> vector<8x1xf32>
    %96 = vector.broadcast %95 : vector<8x1xf32> to vector<8x8xf32>
    %97 = arith.mulf %92, %96 : vector<8x8xf32>
    %cst_45 = arith.constant dense<0.000000e+00> : vector<8x8xf32>
    %98 = tpu.matmul %97, %85, %cst_45 {dimension_numbers = #tpu.dot_dimension_numbers<[1], [0], [0], [1], [0, 0, 1, 1], [], []>} : vector<8x8xf32>, vector<8x8xf32>, vector<8x8xf32> -> vector<8x8xf32>
    %c0_46 = arith.constant 0 : index
    %c0_47 = arith.constant 0 : index
    %c24 = arith.constant 24 : index
    %99 = vector.load %arg5[%c0_46, %c0_47, %c24] : memref<1x8x32xf32, #tpu.memory_space<vmem>>, vector<1x8x8xf32>
    %100 = vector.shape_cast %99 : vector<1x8x8xf32> to vector<8x8xf32>
    %101 = vector.shape_cast %98 : vector<8x8xf32> to vector<1x8x8xf32>
    tpu.vector_store %arg5[%c0_46, %c0_47, %c24], %101 {strides = array<i32>} : memref<1x8x32xf32, #tpu.memory_space<vmem>>, vector<1x8x8xf32>,
    %c0_48 = arith.constant 0 : index
    %c3 = arith.constant 3 : index
    %c0_49 = arith.constant 0 : index
    %c0_50 = arith.constant 0 : index
    %102 = vector.load %arg6[%c0_48, %c3, %c0_49, %c0_50] : memref<1x4x8x8xf32, #tpu.memory_space<vmem>>, vector<1x1x8x8xf32>
    %103 = vector.shape_cast %102 : vector<1x1x8x8xf32> to vector<8x8xf32>
    %104 = vector.shape_cast %97 : vector<8x8xf32> to vector<1x1x8x8xf32>
    tpu.vector_store %arg6[%c0_48, %c3, %c0_49, %c0_50], %104 {strides = array<i32>} : memref<1x4x8x8xf32, #tpu.memory_space<vmem>>, vector<1x1x8x8xf32>,
    return
  }
  func.func @transform_0(%arg0: i32) -> (i32, i32, i32) {
    %c0_i32 = arith.constant 0 : i32
    %c0_i32_0 = arith.constant 0 : i32
    %c0_i32_1 = arith.constant 0 : i32
    return %arg0, %c0_i32, %c0_i32_0 : i32, i32, i32
  }
  func.func @transform_1(%arg0: i32) -> (i32, i32) {
    %c0_i32 = arith.constant 0 : i32
    %c0_i32_0 = arith.constant 0 : i32
    %c0_i32_1 = arith.constant 0 : i32
    return %c0_i32, %c0_i32_0 : i32, i32
  }
  func.func @transform_2(%arg0: i32) -> (i32, i32) {
    %c0_i32 = arith.constant 0 : i32
    %c0_i32_0 = arith.constant 0 : i32
    %c0_i32_1 = arith.constant 0 : i32
    return %c0_i32, %c0_i32_0 : i32, i32
  }
  func.func @transform_3(%arg0: i32) -> (i32, i32, i32) {
    %c0_i32 = arith.constant 0 : i32
    %c0_i32_0 = arith.constant 0 : i32
    %c0_i32_1 = arith.constant 0 : i32
    return %arg0, %c0_i32, %c0_i32_0 : i32, i32, i32
  }
  func.func @transform_4(%arg0: i32) -> (i32, i32, i32) {
    %c0_i32 = arith.constant 0 : i32
    %c0_i32_0 = arith.constant 0 : i32
    %c0_i32_1 = arith.constant 0 : i32
    return %arg0, %c0_i32, %c0_i32_0 : i32, i32, i32
  }
  func.func @transform_5(%arg0: i32) -> (i32, i32, i32, i32) {
    %c0_i32 = arith.constant 0 : i32
    %c0_i32_0 = arith.constant 0 : i32
    %c0_i32_1 = arith.constant 0 : i32
    %c0_i32_2 = arith.constant 0 : i32
    return %arg0, %c0_i32, %c0_i32_0, %c0_i32_1 : i32, i32, i32, i32
  }
}

</mosaic_0001>

<llo_original>
// kernel: tpu_custom_call.1
$region0: #{tpu_custom_call.1}
  #allocation0 [shape = 'u32[]', space=smem, size = 0x4, offset = 0x4, fixed_abs, tag = 'smem constant byte address 0x4 - core index']
  #allocation1 [shape = 'u32[144,128]{1,0:T(1,128)}', space=vmem, size = 0x12000, scoped, tag = 'internal scratch']
  %s0 = inlined_call_operand.hbm [shape: f32[2,8,32], index: 0, kind: input, shape index: {}]
  %s1 = inlined_call_operand.hbm [shape: f32[32,96], index: 1, kind: input, shape index: {}]
  %s2 = inlined_call_operand.vmem [shape: f32[1,96], index: 2, kind: input, shape index: {}]
  %s3 = inlined_call_operand.hbm [shape: f32[2,8,8], index: 3, kind: input, shape index: {}]
  %s4 = inlined_call_operand.hbm [shape: f32[2,8,32], index: 4, kind: output, shape index: {0}]
  %s5 = inlined_call_operand.hbm [shape: f32[2,4,8,8], index: 5, kind: output, shape index: {1}]
  %6 = xla_tuple %s4, %s5
  %s7 = sld [smem:[#allocation0]]
  $region69: #{tpu_custom_call.1} parent=0
    _
  %s9 = ssub.s32 1, %s7
  %s10 = scalar_select 0, %s9, %s7
  $region1: #{tpu_custom_call.1} parent=0
    #allocation2 [shape = 'u8[8192]{0}', space=vmem, size = 0x2000, scoped, tag = 'input window, operand 0']
    #allocation3 [shape = 's32[2]{0}', space=sflag, size = 0x8, scoped, tag = 'scoped memory for tpu_custom_call.1']
    #allocation4 [shape = 's32[2]{0}', space=sflag, size = 0x8, scoped, tag = 'scoped memory for tpu_custom_call.1']
    #allocation5 [shape = 'u8[16384]{0}', space=vmem, size = 0x4000, scoped, tag = 'input window, operand 1, single buffered']
    #allocation6 [shape = 's32[1]{0}', space=sflag, size = 0x4, scoped, tag = 'scoped memory for tpu_custom_call.1']
    #allocation7 [shape = 'u8[8192]{0}', space=vmem, size = 0x2000, scoped, tag = 'input window, operand 3']
    #allocation8 [shape = 'u8[8192]{0}', space=vmem, size = 0x2000, scoped, tag = 'output window, operand 0']
    #allocation9 [shape = 'u8[32768]{0}', space=vmem, size = 0x8000, scoped, tag = 'output window, operand 1']
    #allocation10 [shape = 's32[2]{0}', space=sflag, size = 0x8, scoped, tag = 'scoped memory for tpu_custom_call.1']
    %11 = vsyncpa [#allocation3], 0
    %s12 = scalar_lea.sflag [#allocation3], 1
    %13 = vsyncpa %s12, 0
    %14 = vsyncpa [#allocation6], 0
    %15 = vsyncpa [#allocation4], 0
    %s16 = scalar_lea.sflag [#allocation4], 1
    %17 = vsyncpa %s16, 0
    %18 = vsyncpa [#allocation10], 0
    %s19 = scalar_lea.sflag [#allocation10], 1
    %20 = vsyncpa %s19, 0
    loop: start=0, step=1, limit=4
    $region2: #{tpu_custom_call.1} parent=1 // loop_pre_header
      _
    $region3: #{tpu_custom_call.1} parent=1 // loop_header
      %s22 = sphi 0, %s26
      %p23 = scmp.ge.s32.totalorder %s22, 4
      %s32 = sphi 0, %s34
      %s35 = sphi 0, %s32
      %s36 = sphi 0, %s35
      %s52 = sphi 0, %s36
      %s56 = sphi 0, %s56
      %s58 = sphi 0, %s56
      %s59 = sphi 0, %s58
      %s73 = sphi 0, %s59
      %s77 = sphi 0, %s77
      %s79 = sphi 0, %s77
      %s80 = sphi 0, %s79
      %s94 = sphi 0, %s80
      %s100 = sphi 0, %s102
      %s103 = sphi 0, %s100
      %s104 = sphi 0, %s103
      %s120 = sphi 0, %s104
      %s126 = sphi 0, %s128
      %s129 = sphi 0, %s126
      %s130 = sphi 0, %s129
      %s146 = sphi 0, %s130
      %s152 = sphi 0, %s154
      %s155 = sphi 0, %s152
      %s156 = sphi 0, %s155
      %s172 = sphi 0, %s156
    $region4: #{tpu_custom_call.1} parent=1 // loop_header_branch
      %25 = sbr.rel (%p23) target = $region8
    $region5: #{tpu_custom_call.1} parent=1 // loop_body
      %s27 = ssub.s32 %s22, 1
      %s28 = ssub.s32 %s22, 2
      %s29 = sadd.s32 %s22, 1
      %s30 = ssub.s32 %s22, %s29
      %p31 = scmp.eq.s32.totalorder %s30, 0
      %s33 = sadd.s32 %s32, 1
      %s34 = scalar_select %p31, %s32, %s33
      %p37 = pneg %p31
      %p38 = scmp.eq.s32.totalorder %s22, 1
      %p39 = por %p37, %p38
      %p40 = scmp.ne.s32.totalorder %s32, %s35
      %p41 = scmp.eq.s32.totalorder %s22, 0
      %p42 = por %p40, %p41
      %p43 = scmp.ne.s32.totalorder %s32, %s35
      %p44 = scmp.eq.s32.totalorder %s27, 1
      %p45 = por %p43, %p44
      %p46 = scmp.ne.s32.totalorder %s35, %s36
      %p47 = scmp.eq.s32.totalorder %s27, 0
      %p48 = por %p46, %p47
      %p49 = scmp.ne.s32.totalorder %s35, %s36
      %p50 = scmp.eq.s32.totalorder %s28, 1
      %p51 = por %p49, %p50
      %p53 = scmp.ne.s32.totalorder %s36, %s52
      %p54 = scmp.eq.s32.totalorder %s28, 0
      %p55 = por %p53, %p54
      %s57 = sadd.s32 %s56, 1
      %p60 = scmp.eq.s32.totalorder %s22, 1
      %p61 = scmp.ne.s32.totalorder %s56, %s58
      %p62 = scmp.eq.s32.totalorder %s22, 0
      %p63 = por %p61, %p62
      %p64 = scmp.ne.s32.totalorder %s56, %s58
      %p65 = scmp.eq.s32.totalorder %s27, 1
      %p66 = por %p64, %p65
      %p67 = scmp.ne.s32.totalorder %s58, %s59
      %p68 = scmp.eq.s32.totalorder %s27, 0
      %p69 = por %p67, %p68
      %p70 = scmp.ne.s32.totalorder %s58, %s59
      %p71 = scmp.eq.s32.totalorder %s28, 1
      %p72 = por %p70, %p71
      %p74 = scmp.ne.s32.totalorder %s59, %s73
      %p75 = scmp.eq.s32.totalorder %s28, 0
      %p76 = por %p74, %p75
      %s78 = sadd.s32 %s77, 1
      %p81 = scmp.eq.s32.totalorder %s22, 1
      %p82 = scmp.ne.s32.totalorder %s77, %s79
      %p83 = scmp.eq.s32.totalorder %s22, 0
      %p84 = por %p82, %p83
      %p85 = scmp.ne.s32.totalorder %s77, %s79
      %p86 = scmp.eq.s32.totalorder %s27, 1
      %p87 = por %p85, %p86
      %p88 = scmp.ne.s32.totalorder %s79, %s80
      %p89 = scmp.eq.s32.totalorder %s27, 0
      %p90 = por %p88, %p89
      %p91 = scmp.ne.s32.totalorder %s79, %s80
      %p92 = scmp.eq.s32.totalorder %s28, 1
      %p93 = por %p91, %p92
      %p95 = scmp.ne.s32.totalorder %s80, %s94
      %p96 = scmp.eq.s32.totalorder %s28, 0
      %p97 = por %p95, %p96
      %s98 = ssub.s32 %s22, %s29
      %p99 = scmp.eq.s32.totalorder %s98, 0
      %s101 = sadd.s32 %s100, 1
      %s102 = scalar_select %p99, %s100, %s101
      %p105 = pneg %p99
      %p106 = scmp.eq.s32.totalorder %s22, 1
      %p107 = por %p105, %p106
      %p108 = scmp.ne.s32.totalorder %s100, %s103
      %p109 = scmp.eq.s32.totalorder %s22, 0
      %p110 = por %p108, %p109
      %p111 = scmp.ne.s32.totalorder %s100, %s103
      %p112 = scmp.eq.s32.totalorder %s27, 1
      %p113 = por %p111, %p112
      %p114 = scmp.ne.s32.totalorder %s103, %s104
      %p115 = scmp.eq.s32.totalorder %s27, 0
      %p116 = por %p114, %p115
      %p117 = scmp.ne.s32.totalorder %s103, %s104
      %p118 = scmp.eq.s32.totalorder %s28, 1
      %p119 = por %p117, %p118
      %p121 = scmp.ne.s32.totalorder %s104, %s120
      %p122 = scmp.eq.s32.totalorder %s28, 0
      %p123 = por %p121, %p122
      %s124 = ssub.s32 %s22, %s29
      %p125 = scmp.eq.s32.totalorder %s124, 0
      %s127 = sadd.s32 %s126, 1
      %s128 = scalar_select %p125, %s126, %s127
      %p131 = pneg %p125
      %p132 = scmp.eq.s32.totalorder %s22, 1
      %p133 = por %p131, %p132
      %p134 = scmp.ne.s32.totalorder %s126, %s129
      %p135 = scmp.eq.s32.totalorder %s22, 0
      %p136 = por %p134, %p135
      %p137 = scmp.ne.s32.totalorder %s126, %s129
      %p138 = scmp.eq.s32.totalorder %s27, 1
      %p139 = por %p137, %p138
      %p140 = scmp.ne.s32.totalorder %s129, %s130
      %p141 = scmp.eq.s32.totalorder %s27, 0
      %p142 = por %p140, %p141
      %p143 = scmp.ne.s32.totalorder %s129, %s130
      %p144 = scmp.eq.s32.totalorder %s28, 1
      %p145 = por %p143, %p144
      %p147 = scmp.ne.s32.totalorder %s130, %s146
      %p148 = scmp.eq.s32.totalorder %s28, 0
      %p149 = por %p147, %p148
      %s150 = ssub.s32 %s22, %s29
      %p151 = scmp.eq.s32.totalorder %s150, 0
      %s153 = sadd.s32 %s152, 1
      %s154 = scalar_select %p151, %s152, %s153
      %p157 = pneg %p151
      %p158 = scmp.eq.s32.totalorder %s22, 1
      %p159 = por %p157, %p158
      %p160 = scmp.ne.s32.totalorder %s152, %s155
      %p161 = scmp.eq.s32.totalorder %s22, 0
      %p162 = por %p160, %p161
      %p163 = scmp.ne.s32.totalorder %s152, %s155
      %p164 = scmp.eq.s32.totalorder %s27, 1
      %p165 = por %p163, %p164
      %p166 = scmp.ne.s32.totalorder %s155, %s156
      %p167 = scmp.eq.s32.totalorder %s27, 0
      %p168 = por %p166, %p167
      %p169 = scmp.ne.s32.totalorder %s155, %s156
      %p170 = scmp.eq.s32.totalorder %s28, 1
      %p171 = por %p169, %p170
      %p173 = scmp.ne.s32.totalorder %s156, %s172
      %p174 = scmp.eq.s32.totalorder %s28, 0
      %p175 = por %p173, %p174
      %p176 = scmp.le.s32.totalorder 1, %s22
      %p177 = scmp.lt.s32.totalorder %s22, 3
      %p178 = pnand %p176, %p177
      %p179 = pneg %p178
      // Predicated region
      $region9: #{tpu_custom_call.1} parent=5 // pred_check
        _
      $region10: #{tpu_custom_call.1} parent=5 // pred_check_branch
        %181 = sbr.rel (%p178) target = $region12
      $region11: #{tpu_custom_call.1} parent=5 // pred_region
        %s182 = ssub.s32 %s22, 1
        // Predicated region
        $region13: #{tpu_custom_call.1} parent=11 // pred_check
          %p183 = pneg %p69
        $region14: #{tpu_custom_call.1} parent=11 // pred_check_branch
          %185 = sbr.rel (%p183) target = $region16
        $region15: #{tpu_custom_call.1} parent=11 // pred_region
          %s187 = ssub.s32 512, 512
          %188 = vsyncadd [#allocation6], %s187
          %s189 = sshll.u32 [#allocation5], 4
          %s190 = int_to_ptr.vmem [resolvable:$true] %s189
          %195 = dma.hbm_to_vmem [thread:$0]  %s1, 512, %s190, [#allocation6], 128, 128, 8
        $region16: #{tpu_custom_call.1} parent=11 // pred_fallthru
          _
        // Predicated region
        $region17: #{tpu_custom_call.1} parent=11 // pred_check
          %p196 = pneg %p90
        $region18: #{tpu_custom_call.1} parent=11 // pred_check_branch
          %198 = sbr.rel (%p196) target = $region20
        $region19: #{tpu_custom_call.1} parent=11 // pred_region
          _
        $region20: #{tpu_custom_call.1} parent=11 // pred_fallthru
          _
      $region12: #{tpu_custom_call.1} parent=5 // pred_fallthru
        _
      %p199 = scmp.lt.s32.totalorder %s22, 2
      // Predicated region
      $region21: #{tpu_custom_call.1} parent=5 // pred_check
        %p200 = pneg %p199
      $region22: #{tpu_custom_call.1} parent=5 // pred_check_branch
        %202 = sbr.rel (%p200) target = $region24
      $region23: #{tpu_custom_call.1} parent=5 // pred_region
        // Predicated region
        $region25: #{tpu_custom_call.1} parent=23 // pred_check
          %p203 = pneg %p42
        $region26: #{tpu_custom_call.1} parent=23 // pred_check_branch
          %205 = sbr.rel (%p203) target = $region28
        $region27: #{tpu_custom_call.1} parent=23 // pred_region
          %s206 = sand.u32 %s22, 1
          %s207 = scalar_lea.sflag [#allocation3], %s206
          %s208 = sand.u32 %s32, 1
          %s209 = smul.addr %s208, 8
          %s210 = scalar_lea.vmem [#allocation2], %s209
          %s212 = ssub.s32 128, 128
          %213 = vsyncadd %s207, %s212
          %s214 = smul.addr %s22, 128
          %s215 = scalar_lea.hbm %s0, %s214
          %s217 = sshll.u32 %s210, 4
          %s218 = int_to_ptr.vmem [resolvable:$true] %s217
          %220 = dma.hbm_to_vmem [thread:$0]  %s215, 128, %s218, %s207
        $region28: #{tpu_custom_call.1} parent=23 // pred_fallthru
          _
        // Predicated region
        $region29: #{tpu_custom_call.1} parent=23 // pred_check
          %p221 = pneg %p110
        $region30: #{tpu_custom_call.1} parent=23 // pred_check_branch
          %223 = sbr.rel (%p221) target = $region32
        $region31: #{tpu_custom_call.1} parent=23 // pred_region
          %s224 = sand.u32 %s22, 1
          %s225 = scalar_lea.sflag [#allocation3], %s224
          %s226 = sand.u32 %s100, 1
          %s227 = smul.addr %s226, 8
          %s228 = scalar_lea.vmem [#allocation7], %s227
          %s230 = ssub.s32 128, 128
          %231 = vsyncadd %s225, %s230
          %s232 = smul.addr %s22, 128
          %s233 = scalar_lea.hbm %s3, %s232
          %s235 = sshll.u32 %s228, 4
          %s236 = int_to_ptr.vmem [resolvable:$true] %s235
          %238 = dma.hbm_to_vmem [thread:$0]  %s233, 128, %s236, %s225
        $region32: #{tpu_custom_call.1} parent=23 // pred_fallthru
          _
      $region24: #{tpu_custom_call.1} parent=5 // pred_fallthru
        _
      %p239 = scmp.le.s32.totalorder 1, %s22
      %p240 = scmp.lt.s32.totalorder %s22, 3
      %p241 = pnand %p239, %p240
      %p242 = pneg %p241
      // Predicated region
      $region33: #{tpu_custom_call.1} parent=5 // pred_check
        _
      $region34: #{tpu_custom_call.1} parent=5 // pred_check_branch
        %244 = sbr.rel (%p241) target = $region36
      $region35: #{tpu_custom_call.1} parent=5 // pred_region
        %s245 = ssub.s32 %s22, 1
        %s246 = sand.u32 %s27, 1
        %s247 = scalar_lea.sflag [#allocation3], %s246
        %s248 = sand.u32 %s35, 1
        %s249 = smul.addr %s248, 8
        %s250 = scalar_lea.vmem [#allocation2], %s249
        // Predicated region
        $region37: #{tpu_custom_call.1} parent=35 // pred_check
          %p251 = pneg %p48
        $region38: #{tpu_custom_call.1} parent=35 // pred_check_branch
          %253 = sbr.rel (%p251) target = $region40
        $region39: #{tpu_custom_call.1} parent=35 // pred_region
          %254 = dma.done %s247, 128
        $region40: #{tpu_custom_call.1} parent=35 // pred_fallthru
          _
        // Predicated region
        $region41: #{tpu_custom_call.1} parent=35 // pred_check
          %p255 = pneg %p69
        $region42: #{tpu_custom_call.1} parent=35 // pred_check_branch
          %257 = sbr.rel (%p255) target = $region44
        $region43: #{tpu_custom_call.1} parent=35 // pred_region
          %258 = dma.done [#allocation6], 512
        $region44: #{tpu_custom_call.1} parent=35 // pred_fallthru
          _
        %s259 = sand.u32 %s27, 1
        %s260 = scalar_lea.sflag [#allocation3], %s259
        %s261 = sand.u32 %s103, 1
        %s262 = smul.addr %s261, 8
        %s263 = scalar_lea.vmem [#allocation7], %s262
        // Predicated region
        $region45: #{tpu_custom_call.1} parent=35 // pred_check
          %p264 = pneg %p116
        $region46: #{tpu_custom_call.1} parent=35 // pred_check_branch
          %266 = sbr.rel (%p264) target = $region48
        $region47: #{tpu_custom_call.1} parent=35 // pred_region
          %267 = dma.done %s260, 128
        $region48: #{tpu_custom_call.1} parent=35 // pred_fallthru
          _
        %s268 = sand.u32 %s27, 1
        %s269 = scalar_lea.sflag [#allocation3], %s268
        %s270 = sand.u32 %s35, 1
        %s271 = smul.addr %s270, 8
        %s272 = scalar_lea.vmem [#allocation2], %s271
        %p273 = pneg %p48
        %p274 = pneg %p45
        %p275 = pneg %p69
        %p276 = pneg %p66
        %p277 = pneg %p90
        %p278 = pneg %p87
        %s279 = sand.u32 %s27, 1
        %s280 = scalar_lea.sflag [#allocation3], %s279
        %s281 = sand.u32 %s103, 1
        %s282 = smul.addr %s281, 8
        %s283 = scalar_lea.vmem [#allocation7], %s282
        %p284 = pneg %p116
        %p285 = pneg %p113
        %p286 = pneg %p142
        %p287 = pneg %p139
        %s288 = sand.u32 %s129, 1
        %s289 = scalar_lea.sflag [#allocation4], %s288
        %s290 = sand.u32 %s129, 1
        %s291 = smul.addr %s290, 8
        %s292 = scalar_lea.vmem [#allocation8], %s291
        %p293 = pneg %p168
        %p294 = pneg %p165
        %s295 = sand.u32 %s155, 1
        %s296 = scalar_lea.sflag [#allocation10], %s295
        %s297 = sand.u32 %s155, 1
        %s298 = smul.addr %s297, 32
        %s299 = scalar_lea.vmem [#allocation9], %s298
        %v300 = vld [vmem:[%s250] sm:$0xff]
        %v301 = vld [vmem:[#allocation5] sm:$0xff]
        %v302 = vld [vmem:[#allocation5 + $0x8] sm:$0xff]
        %v303 = vld [vmem:[#allocation5 + $0x10] sm:$0xff]
        %v304 = vld [vmem:[#allocation5 + $0x18] sm:$0xff]
        %v305 = vld [vmem:[%s2] sm:$0x1]
        %v307 = vlaneseq
        %v308 = vshrl.u32 %v307, 7
        %v309 = vsub.s32 0, %v308
        %v310 = vrot.slane %v305, %v309
        %vm312 = vcmask 261120
        %v314 = vsel %vm312, %v300, 0
        %316 = vmatprep.subr.mxu0 0.0
        %317 = vmatpush1.msra.mxu0 %v301
        %318 = vmatprep.subr.mxu0 0.0
        %319 = vmatpush1.msra.mxu0 %v302
        %320 = vmatprep.subr.mxu0 0.0
        %321 = vmatpush1.msra.mxu0 %v303
        %322 = vmatprep.subr.mxu0 0.0
        %323 = vmatpush1.msra.mxu0 %v304
        %324 = vmatprep.subr.mxu0 0.0
        %325 = vmatpush1.msra.mxu0 0.0
        %326 = vmatprep.subr.mxu0 0.0
        %327 = vmatpush1.msra.mxu0 0.0
        %328 = vmatprep.subr.mxu0 0.0
        %329 = vmatpush1.msra.mxu0 0.0
        %330 = vmatprep.subr.mxu0 0.0
        %331 = vmatpush1.msra.mxu0 0.0
        %332 = vmatprep.subr.mxu0 0.0
        %333 = vmatpush1.msra.mxu0 0.0
        %334 = vmatprep.subr.mxu0 0.0
        %335 = vmatpush1.msra.mxu0 0.0
        %336 = vmatprep.subr.mxu0 0.0
        %337 = vmatpush1.msra.mxu0 0.0
        %338 = vmatprep.subr.mxu0 0.0
        %339 = vmatpush1.msra.mxu0 0.0
        %340 = vmatprep.subr.mxu0 0.0
        %341 = vmatpush1.msra.mxu0 0.0
        %342 = vmatprep.subr.mxu0 0.0
        %343 = vmatpush1.msra.mxu0 0.0
        %344 = vmatprep.subr.mxu0 0.0
        %345 = vmatpush1.msra.mxu0 0.0
        %346 = vmatprep.subr.mxu0 0.0
        %347 = vmatpush1.msra.mxu0 0.0
        %348 = vmatprep.subr.mxu0 0.0
        %349 = vmatpush1.msra.mxu0 0.0
        %350 = vmatprep.subr.mxu0 0.0
        %351 = vmatpush1.msra.mxu0 0.0
        %352 = vmatprep.subr.mxu0 0.0
        %353 = vmatpush1.msra.mxu0 0.0
        %354 = vmatprep.subr.mxu0 0.0
        %355 = vmatpush1.msra.mxu0 0.0
        %356 = vmatprep.subr.mxu0 0.0
        %357 = vmatpush1.msra.mxu0 0.0
        %358 = vmatprep.subr.mxu0 0.0
        %359 = vmatpush1.msra.mxu0 0.0
        %360 = vmatprep.subr.mxu0 0.0
        %361 = vmatpush1.msra.mxu0 0.0
        %362 = vmatprep.subr.mxu0 0.0
        %363 = vmatpush1.msra.mxu0 0.0
        %364 = vmatprep.subr.mxu0 0.0
        %365 = vmatpush1.msra.mxu0 0.0
        %366 = vmatprep.subr.mxu0 0.0
        %367 = vmatpush1.msra.mxu0 0.0
        %368 = vmatprep.subr.mxu0 0.0
        %369 = vmatpush1.msra.mxu0 0.0
        %370 = vmatprep.subr.mxu0 0.0
        %371 = vmatpush1.msra.mxu0 0.0
        %372 = vmatprep.subr.mxu0 0.0
        %373 = vmatpush1.msra.mxu0 0.0
        %374 = vmatprep.subr.mxu0 0.0
        %375 = vmatpush1.msra.mxu0 0.0
        %376 = vmatprep.subr.mxu0 0.0
        %377 = vmatpush1.msra.mxu0 0.0
        %378 = vmatprep.subr.mxu0 0.0
        %379 = vmatpush1.msra.mxu0 0.0
        %380 = vmatprep.mubr.f32.mxu0 0.0
        %381 = vmatmul.mubr.f32.gmra.mrb[0].mxu0 %v314
        %v382 = vpop.f32.mrb[0].mxu0
        %v383 = vadd.f32 %v310, %v382
        %v384 = vpop.f32.mrb[0].mxu0
        %385 = vdwg.mxu0
        %v386 = vld [vmem:[%s263] sm:$0xff]
        %v387 = vmul.f32 %v383, 0.35355338
        %389 = vrot.lane.b32.xlu0 %v383, 96
        %v390 = vpop.permute.xlu0 %389
        %vm391 = vcmask 64512
        %v393 = vsel %vm391, %v387, 0
        %v395 = vsel %vm391, %v390, 0
        %397 = vmatprep.subr.mxu0 0.0
        %398 = vmatpush1.xpose.msra.mxu0 %v395
        %399 = vmatprep.subr.mxu0 0.0
        %400 = vmatpush1.xpose.msra.mxu0 0.0
        %401 = vmatprep.subr.mxu0 0.0
        %402 = vmatpush1.xpose.msra.mxu0 0.0
        %403 = vmatprep.subr.mxu0 0.0
        %404 = vmatpush1.xpose.msra.mxu0 0.0
        %405 = vmatprep.subr.mxu0 0.0
        %406 = vmatpush1.xpose.msra.mxu0 0.0
        %407 = vmatprep.subr.mxu0 0.0
        %408 = vmatpush1.xpose.msra.mxu0 0.0
        %409 = vmatprep.subr.mxu0 0.0
        %410 = vmatpush1.xpose.msra.mxu0 0.0
        %411 = vmatprep.subr.mxu0 0.0
        %412 = vmatpush1.xpose.msra.mxu0 0.0
        %413 = vmatprep.subr.mxu0 0.0
        %414 = vmatpush1.xpose.msra.mxu0 0.0
        %415 = vmatprep.subr.mxu0 0.0
        %416 = vmatpush1.xpose.msra.mxu0 0.0
        %417 = vmatprep.subr.mxu0 0.0
        %418 = vmatpush1.xpose.msra.mxu0 0.0
        %419 = vmatprep.subr.mxu0 0.0
        %420 = vmatpush1.xpose.msra.mxu0 0.0
        %421 = vmatprep.subr.mxu0 0.0
        %422 = vmatpush1.xpose.msra.mxu0 0.0
        %423 = vmatprep.subr.mxu0 0.0
        %424 = vmatpush1.xpose.msra.mxu0 0.0
        %425 = vmatprep.subr.mxu0 0.0
        %426 = vmatpush1.xpose.msra.mxu0 0.0
        %427 = vmatprep.subr.mxu0 0.0
        %428 = vmatpush1.xpose.msra.mxu0 0.0
        %429 = vmatprep.subr.mxu0 0.0
        %430 = vmatpush1.xpose.msra.mxu0 0.0
        %431 = vmatprep.subr.mxu0 0.0
        %432 = vmatpush1.xpose.msra.mxu0 0.0
        %433 = vmatprep.subr.mxu0 0.0
        %434 = vmatpush1.xpose.msra.mxu0 0.0
        %435 = vmatprep.subr.mxu0 0.0
        %436 = vmatpush1.xpose.msra.mxu0 0.0
        %437 = vmatprep.subr.mxu0 0.0
        %438 = vmatpush1.xpose.msra.mxu0 0.0
        %439 = vmatprep.subr.mxu0 0.0
        %440 = vmatpush1.xpose.msra.mxu0 0.0
        %441 = vmatprep.subr.mxu0 0.0
        %442 = vmatpush1.xpose.msra.mxu0 0.0
        %443 = vmatprep.subr.mxu0 0.0
        %444 = vmatpush1.xpose.msra.mxu0 0.0
        %445 = vmatprep.subr.mxu0 0.0
        %446 = vmatpush1.xpose.msra.mxu0 0.0
        %447 = vmatprep.subr.mxu0 0.0
        %448 = vmatpush1.xpose.msra.mxu0 0.0
        %449 = vmatprep.subr.mxu0 0.0
        %450 = vmatpush1.xpose.msra.mxu0 0.0
        %451 = vmatprep.subr.mxu0 0.0
        %452 = vmatpush1.xpose.msra.mxu0 0.0
        %453 = vmatprep.subr.mxu0 0.0
        %454 = vmatpush1.xpose.msra.mxu0 0.0
        %455 = vmatprep.subr.mxu0 0.0
        %456 = vmatpush1.xpose.msra.mxu0 0.0
        %457 = vmatprep.subr.mxu0 0.0
        %458 = vmatpush1.xpose.msra.mxu0 0.0
        %459 = vmatprep.subr.mxu0 0.0
        %460 = vmatpush1.xpose.msra.mxu0 0.0
        %461 = vmatprep.mubr.f32.mxu0 0.0
        %462 = vmatmul.mubr.f32.gmra.mrb[0].mxu0 %v393
        %v463 = vpop.f32.mrb[0].mxu0
        %v464 = vadd.f32 %v386, %v463
        %v465 = vpop.f32.mrb[0].mxu0
        %466 = vdwg.mxu0
        %v467 = vsel %vm391, %v464, -inf
        %468 = vmax.xlane.f32.xlu0 %v467
        %v469 = vpop.xlane.xlu0 %468
        %v470 = vsub.f32 %v464, %v469
        %v471 = vmul.f32 %v470, 1.442695
        %v472 = vpow.pop %v471
        %v473 = vsel %vm391, %v472, 0.0
        %474 = vadd.xlane.f32.xlu0 %v473
        %v475 = vpop.xlane.xlu0 %474
        %v476 = vrcp.pop %v475
        %v477 = vmul.f32 %v472, %v476
        %478 = vrot.lane.b32.xlu0 %v383, 64
        %v479 = vpop.permute.xlu0 %478
        %v482 = vsel %vm391, %v477, 0
        %484 = vmatprep.subr.mxu0 0.0
        %485 = vmatpush1.msra.mxu0 %v479
        %486 = vmatprep.subr.mxu0 0.0
        %487 = vmatpush1.msra.mxu0 0.0
        %488 = vmatprep.subr.mxu0 0.0
        %489 = vmatpush1.msra.mxu0 0.0
        %490 = vmatprep.subr.mxu0 0.0
        %491 = vmatpush1.msra.mxu0 0.0
        %492 = vmatprep.subr.mxu0 0.0
        %493 = vmatpush1.msra.mxu0 0.0
        %494 = vmatprep.subr.mxu0 0.0
        %495 = vmatpush1.msra.mxu0 0.0
        %496 = vmatprep.subr.mxu0 0.0
        %497 = vmatpush1.msra.mxu0 0.0
        %498 = vmatprep.subr.mxu0 0.0
        %499 = vmatpush1.msra.mxu0 0.0
        %500 = vmatprep.subr.mxu0 0.0
        %501 = vmatpush1.msra.mxu0 0.0
        %502 = vmatprep.subr.mxu0 0.0
        %503 = vmatpush1.msra.mxu0 0.0
        %504 = vmatprep.subr.mxu0 0.0
        %505 = vmatpush1.msra.mxu0 0.0
        %506 = vmatprep.subr.mxu0 0.0
        %507 = vmatpush1.msra.mxu0 0.0
        %508 = vmatprep.subr.mxu0 0.0
        %509 = vmatpush1.msra.mxu0 0.0
        %510 = vmatprep.subr.mxu0 0.0
        %511 = vmatpush1.msra.mxu0 0.0
        %512 = vmatprep.subr.mxu0 0.0
        %513 = vmatpush1.msra.mxu0 0.0
        %514 = vmatprep.subr.mxu0 0.0
        %515 = vmatpush1.msra.mxu0 0.0
        %516 = vmatprep.subr.mxu0 0.0
        %517 = vmatpush1.msra.mxu0 0.0
        %518 = vmatprep.subr.mxu0 0.0
        %519 = vmatpush1.msra.mxu0 0.0
        %520 = vmatprep.subr.mxu0 0.0
        %521 = vmatpush1.msra.mxu0 0.0
        %522 = vmatprep.subr.mxu0 0.0
        %523 = vmatpush1.msra.mxu0 0.0
        %524 = vmatprep.subr.mxu0 0.0
        %525 = vmatpush1.msra.mxu0 0.0
        %526 = vmatprep.subr.mxu0 0.0
        %527 = vmatpush1.msra.mxu0 0.0
        %528 = vmatprep.subr.mxu0 0.0
        %529 = vmatpush1.msra.mxu0 0.0
        %530 = vmatprep.subr.mxu0 0.0
        %531 = vmatpush1.msra.mxu0 0.0
        %532 = vmatprep.subr.mxu0 0.0
        %533 = vmatpush1.msra.mxu0 0.0
        %534 = vmatprep.subr.mxu0 0.0
        %535 = vmatpush1.msra.mxu0 0.0
        %536 = vmatprep.subr.mxu0 0.0
        %537 = vmatpush1.msra.mxu0 0.0
        %538 = vmatprep.subr.mxu0 0.0
        %539 = vmatpush1.msra.mxu0 0.0
        %540 = vmatprep.subr.mxu0 0.0
        %541 = vmatpush1.msra.mxu0 0.0
        %542 = vmatprep.subr.mxu0 0.0
        %543 = vmatpush1.msra.mxu0 0.0
        %544 = vmatprep.subr.mxu0 0.0
        %545 = vmatpush1.msra.mxu0 0.0
        %546 = vmatprep.subr.mxu0 0.0
        %547 = vmatpush1.msra.mxu0 0.0
        %548 = vmatprep.mubr.f32.mxu0 0.0
        %549 = vmatmul.mubr.f32.gmra.mrb[0].mxu0 %v482
        %v550 = vpop.f32.mrb[0].mxu0
        %v551 = vadd.f32 0.0, %v550
        %v552 = vpop.f32.mrb[0].mxu0
        %553 = vdwg.mxu0
        %554 = vst.msk [vmem:[%s292] sm:$0xff] %vm391, %v551
        %555 = vst.msk [vmem:[%s299] sm:$0xff] %vm391, %v477
        %556 = vrot.lane.b32.xlu0 %v387, 120
        %v557 = vpop.permute.xlu0 %556
        %558 = vrot.lane.b32.xlu0 %v383, 88
        %v559 = vpop.permute.xlu0 %558
        %v560 = vsel %vm391, %v557, 0
        %v562 = vsel %vm391, %v559, 0
        %564 = vmatprep.subr.mxu0 0.0
        %565 = vmatpush1.xpose.msra.mxu0 %v562
        %566 = vmatprep.subr.mxu0 0.0
        %567 = vmatpush1.xpose.msra.mxu0 0.0
        %568 = vmatprep.subr.mxu0 0.0
        %569 = vmatpush1.xpose.msra.mxu0 0.0
        %570 = vmatprep.subr.mxu0 0.0
        %571 = vmatpush1.xpose.msra.mxu0 0.0
        %572 = vmatprep.subr.mxu0 0.0
        %573 = vmatpush1.xpose.msra.mxu0 0.0
        %574 = vmatprep.subr.mxu0 0.0
        %575 = vmatpush1.xpose.msra.mxu0 0.0
        %576 = vmatprep.subr.mxu0 0.0
        %577 = vmatpush1.xpose.msra.mxu0 0.0
        %578 = vmatprep.subr.mxu0 0.0
        %579 = vmatpush1.xpose.msra.mxu0 0.0
        %580 = vmatprep.subr.mxu0 0.0
        %581 = vmatpush1.xpose.msra.mxu0 0.0
        %582 = vmatprep.subr.mxu0 0.0
        %583 = vmatpush1.xpose.msra.mxu0 0.0
        %584 = vmatprep.subr.mxu0 0.0
        %585 = vmatpush1.xpose.msra.mxu0 0.0
        %586 = vmatprep.subr.mxu0 0.0
        %587 = vmatpush1.xpose.msra.mxu0 0.0
        %588 = vmatprep.subr.mxu0 0.0
        %589 = vmatpush1.xpose.msra.mxu0 0.0
        %590 = vmatprep.subr.mxu0 0.0
        %591 = vmatpush1.xpose.msra.mxu0 0.0
        %592 = vmatprep.subr.mxu0 0.0
        %593 = vmatpush1.xpose.msra.mxu0 0.0
        %594 = vmatprep.subr.mxu0 0.0
        %595 = vmatpush1.xpose.msra.mxu0 0.0
        %596 = vmatprep.subr.mxu0 0.0
        %597 = vmatpush1.xpose.msra.mxu0 0.0
        %598 = vmatprep.subr.mxu0 0.0
        %599 = vmatpush1.xpose.msra.mxu0 0.0
        %600 = vmatprep.subr.mxu0 0.0
        %601 = vmatpush1.xpose.msra.mxu0 0.0
        %602 = vmatprep.subr.mxu0 0.0
        %603 = vmatpush1.xpose.msra.mxu0 0.0
        %604 = vmatprep.subr.mxu0 0.0
        %605 = vmatpush1.xpose.msra.mxu0 0.0
        %606 = vmatprep.subr.mxu0 0.0
        %607 = vmatpush1.xpose.msra.mxu0 0.0
        %608 = vmatprep.subr.mxu0 0.0
        %609 = vmatpush1.xpose.msra.mxu0 0.0
        %610 = vmatprep.subr.mxu0 0.0
        %611 = vmatpush1.xpose.msra.mxu0 0.0
        %612 = vmatprep.subr.mxu0 0.0
        %613 = vmatpush1.xpose.msra.mxu0 0.0
        %614 = vmatprep.subr.mxu0 0.0
        %615 = vmatpush1.xpose.msra.mxu0 0.0
        %616 = vmatprep.subr.mxu0 0.0
        %617 = vmatpush1.xpose.msra.mxu0 0.0
        %618 = vmatprep.subr.mxu0 0.0
        %619 = vmatpush1.xpose.msra.mxu0 0.0
        %620 = vmatprep.subr.mxu0 0.0
        %621 = vmatpush1.xpose.msra.mxu0 0.0
        %622 = vmatprep.subr.mxu0 0.0
        %623 = vmatpush1.xpose.msra.mxu0 0.0
        %624 = vmatprep.subr.mxu0 0.0
        %625 = vmatpush1.xpose.msra.mxu0 0.0
        %626 = vmatprep.subr.mxu0 0.0
        %627 = vmatpush1.xpose.msra.mxu0 0.0
        %628 = vmatprep.mubr.f32.mxu0 0.0
        %629 = vmatmul.mubr.f32.gmra.mrb[0].mxu0 %v560
        %v630 = vpop.f32.mrb[0].mxu0
        %v631 = vadd.f32 %v386, %v630
        %v632 = vpop.f32.mrb[0].mxu0
        %633 = vdwg.mxu0
        %v634 = vsel %vm391, %v631, -inf
        %635 = vmax.xlane.f32.xlu0 %v634
        %v636 = vpop.xlane.xlu0 %635
        %v637 = vsub.f32 %v631, %v636
        %v638 = vmul.f32 %v637, 1.442695
        %v639 = vpow.pop %v638
        %v640 = vsel %vm391, %v639, 0.0
        %641 = vadd.xlane.f32.xlu0 %v640
        %v642 = vpop.xlane.xlu0 %641
        %v643 = vrcp.pop %v642
        %v644 = vmul.f32 %v639, %v643
        %645 = vrot.lane.b32.xlu0 %v383, 56
        %v646 = vpop.permute.xlu0 %645
        %v649 = vsel %vm391, %v644, 0
        %651 = vmatprep.subr.mxu0 0.0
        %652 = vmatpush1.msra.mxu0 %v646
        %653 = vmatprep.subr.mxu0 0.0
        %654 = vmatpush1.msra.mxu0 0.0
        %655 = vmatprep.subr.mxu0 0.0
        %656 = vmatpush1.msra.mxu0 0.0
        %657 = vmatprep.subr.mxu0 0.0
        %658 = vmatpush1.msra.mxu0 0.0
        %659 = vmatprep.subr.mxu0 0.0
        %660 = vmatpush1.msra.mxu0 0.0
        %661 = vmatprep.subr.mxu0 0.0
        %662 = vmatpush1.msra.mxu0 0.0
        %663 = vmatprep.subr.mxu0 0.0
        %664 = vmatpush1.msra.mxu0 0.0
        %665 = vmatprep.subr.mxu0 0.0
        %666 = vmatpush1.msra.mxu0 0.0
        %667 = vmatprep.subr.mxu0 0.0
        %668 = vmatpush1.msra.mxu0 0.0
        %669 = vmatprep.subr.mxu0 0.0
        %670 = vmatpush1.msra.mxu0 0.0
        %671 = vmatprep.subr.mxu0 0.0
        %672 = vmatpush1.msra.mxu0 0.0
        %673 = vmatprep.subr.mxu0 0.0
        %674 = vmatpush1.msra.mxu0 0.0
        %675 = vmatprep.subr.mxu0 0.0
        %676 = vmatpush1.msra.mxu0 0.0
        %677 = vmatprep.subr.mxu0 0.0
        %678 = vmatpush1.msra.mxu0 0.0
        %679 = vmatprep.subr.mxu0 0.0
        %680 = vmatpush1.msra.mxu0 0.0
        %681 = vmatprep.subr.mxu0 0.0
        %682 = vmatpush1.msra.mxu0 0.0
        %683 = vmatprep.subr.mxu0 0.0
        %684 = vmatpush1.msra.mxu0 0.0
        %685 = vmatprep.subr.mxu0 0.0
        %686 = vmatpush1.msra.mxu0 0.0
        %687 = vmatprep.subr.mxu0 0.0
        %688 = vmatpush1.msra.mxu0 0.0
        %689 = vmatprep.subr.mxu0 0.0
        %690 = vmatpush1.msra.mxu0 0.0
        %691 = vmatprep.subr.mxu0 0.0
        %692 = vmatpush1.msra.mxu0 0.0
        %693 = vmatprep.subr.mxu0 0.0
        %694 = vmatpush1.msra.mxu0 0.0
        %695 = vmatprep.subr.mxu0 0.0
        %696 = vmatpush1.msra.mxu0 0.0
        %697 = vmatprep.subr.mxu0 0.0
        %698 = vmatpush1.msra.mxu0 0.0
        %699 = vmatprep.subr.mxu0 0.0
        %700 = vmatpush1.msra.mxu0 0.0
        %701 = vmatprep.subr.mxu0 0.0
        %702 = vmatpush1.msra.mxu0 0.0
        %703 = vmatprep.subr.mxu0 0.0
        %704 = vmatpush1.msra.mxu0 0.0
        %705 = vmatprep.subr.mxu0 0.0
        %706 = vmatpush1.msra.mxu0 0.0
        %707 = vmatprep.subr.mxu0 0.0
        %708 = vmatpush1.msra.mxu0 0.0
        %709 = vmatprep.subr.mxu0 0.0
        %710 = vmatpush1.msra.mxu0 0.0
        %711 = vmatprep.subr.mxu0 0.0
        %712 = vmatpush1.msra.mxu0 0.0
        %713 = vmatprep.subr.mxu0 0.0
        %714 = vmatpush1.msra.mxu0 0.0
        %715 = vmatprep.mubr.f32.mxu0 0.0
        %716 = vmatmul.mubr.f32.gmra.mrb[0].mxu0 %v649
        %v717 = vpop.f32.mrb[0].mxu0
        %v718 = vadd.f32 0.0, %v717
        %v719 = vpop.f32.mrb[0].mxu0
        %720 = vdwg.mxu0
        %722 = vrot.lane.b32.xlu0 %v718, 8
        %v723 = vpop.permute.xlu0 %722
        %vm725 = vcmask 130112
        %726 = vst.msk [vmem:[%s292] sm:$0xff] %vm725, %v723
        %s727 = scalar_lea.vmem %s299, 8 [#allocation9]
        %728 = vst.msk [vmem:[%s727] sm:$0xff] %vm391, %v644
        %729 = vrot.lane.b32.xlu0 %v387, 112
        %v730 = vpop.permute.xlu0 %729
        %731 = vrot.lane.b32.xlu0 %v383, 80
        %v732 = vpop.permute.xlu0 %731
        %v733 = vsel %vm391, %v730, 0
        %v735 = vsel %vm391, %v732, 0
        %737 = vmatprep.subr.mxu0 0.0
        %738 = vmatpush1.xpose.msra.mxu0 %v735
        %739 = vmatprep.subr.mxu0 0.0
        %740 = vmatpush1.xpose.msra.mxu0 0.0
        %741 = vmatprep.subr.mxu0 0.0
        %742 = vmatpush1.xpose.msra.mxu0 0.0
        %743 = vmatprep.subr.mxu0 0.0
        %744 = vmatpush1.xpose.msra.mxu0 0.0
        %745 = vmatprep.subr.mxu0 0.0
        %746 = vmatpush1.xpose.msra.mxu0 0.0
        %747 = vmatprep.subr.mxu0 0.0
        %748 = vmatpush1.xpose.msra.mxu0 0.0
        %749 = vmatprep.subr.mxu0 0.0
        %750 = vmatpush1.xpose.msra.mxu0 0.0
        %751 = vmatprep.subr.mxu0 0.0
        %752 = vmatpush1.xpose.msra.mxu0 0.0
        %753 = vmatprep.subr.mxu0 0.0
        %754 = vmatpush1.xpose.msra.mxu0 0.0
        %755 = vmatprep.subr.mxu0 0.0
        %756 = vmatpush1.xpose.msra.mxu0 0.0
        %757 = vmatprep.subr.mxu0 0.0
        %758 = vmatpush1.xpose.msra.mxu0 0.0
        %759 = vmatprep.subr.mxu0 0.0
        %760 = vmatpush1.xpose.msra.mxu0 0.0
        %761 = vmatprep.subr.mxu0 0.0
        %762 = vmatpush1.xpose.msra.mxu0 0.0
        %763 = vmatprep.subr.mxu0 0.0
        %764 = vmatpush1.xpose.msra.mxu0 0.0
        %765 = vmatprep.subr.mxu0 0.0
        %766 = vmatpush1.xpose.msra.mxu0 0.0
        %767 = vmatprep.subr.mxu0 0.0
        %768 = vmatpush1.xpose.msra.mxu0 0.0
        %769 = vmatprep.subr.mxu0 0.0
        %770 = vmatpush1.xpose.msra.mxu0 0.0
        %771 = vmatprep.subr.mxu0 0.0
        %772 = vmatpush1.xpose.msra.mxu0 0.0
        %773 = vmatprep.subr.mxu0 0.0
        %774 = vmatpush1.xpose.msra.mxu0 0.0
        %775 = vmatprep.subr.mxu0 0.0
        %776 = vmatpush1.xpose.msra.mxu0 0.0
        %777 = vmatprep.subr.mxu0 0.0
        %778 = vmatpush1.xpose.msra.mxu0 0.0
        %779 = vmatprep.subr.mxu0 0.0
        %780 = vmatpush1.xpose.msra.mxu0 0.0
        %781 = vmatprep.subr.mxu0 0.0
        %782 = vmatpush1.xpose.msra.mxu0 0.0
        %783 = vmatprep.subr.mxu0 0.0
        %784 = vmatpush1.xpose.msra.mxu0 0.0
        %785 = vmatprep.subr.mxu0 0.0
        %786 = vmatpush1.xpose.msra.mxu0 0.0
        %787 = vmatprep.subr.mxu0 0.0
        %788 = vmatpush1.xpose.msra.mxu0 0.0
        %789 = vmatprep.subr.mxu0 0.0
        %790 = vmatpush1.xpose.msra.mxu0 0.0
        %791 = vmatprep.subr.mxu0 0.0
        %792 = vmatpush1.xpose.msra.mxu0 0.0
        %793 = vmatprep.subr.mxu0 0.0
        %794 = vmatpush1.xpose.msra.mxu0 0.0
        %795 = vmatprep.subr.mxu0 0.0
        %796 = vmatpush1.xpose.msra.mxu0 0.0
        %797 = vmatprep.subr.mxu0 0.0
        %798 = vmatpush1.xpose.msra.mxu0 0.0
        %799 = vmatprep.subr.mxu0 0.0
        %800 = vmatpush1.xpose.msra.mxu0 0.0
        %801 = vmatprep.mubr.f32.mxu0 0.0
        %802 = vmatmul.mubr.f32.gmra.mrb[0].mxu0 %v733
        %v803 = vpop.f32.mrb[0].mxu0
        %v804 = vadd.f32 %v386, %v803
        %v805 = vpop.f32.mrb[0].mxu0
        %806 = vdwg.mxu0
        %v807 = vsel %vm391, %v804, -inf
        %808 = vmax.xlane.f32.xlu0 %v807
        %v809 = vpop.xlane.xlu0 %808
        %v810 = vsub.f32 %v804, %v809
        %v811 = vmul.f32 %v810, 1.442695
        %v812 = vpow.pop %v811
        %v813 = vsel %vm391, %v812, 0.0
        %814 = vadd.xlane.f32.xlu0 %v813
        %v815 = vpop.xlane.xlu0 %814
        %v816 = vrcp.pop %v815
        %v817 = vmul.f32 %v812, %v816
        %818 = vrot.lane.b32.xlu0 %v383, 48
        %v819 = vpop.permute.xlu0 %818
        %v822 = vsel %vm391, %v817, 0
        %824 = vmatprep.subr.mxu0 0.0
        %825 = vmatpush1.msra.mxu0 %v819
        %826 = vmatprep.subr.mxu0 0.0
        %827 = vmatpush1.msra.mxu0 0.0
        %828 = vmatprep.subr.mxu0 0.0
        %829 = vmatpush1.msra.mxu0 0.0
        %830 = vmatprep.subr.mxu0 0.0
        %831 = vmatpush1.msra.mxu0 0.0
        %832 = vmatprep.subr.mxu0 0.0
        %833 = vmatpush1.msra.mxu0 0.0
        %834 = vmatprep.subr.mxu0 0.0
        %835 = vmatpush1.msra.mxu0 0.0
        %836 = vmatprep.subr.mxu0 0.0
        %837 = vmatpush1.msra.mxu0 0.0
        %838 = vmatprep.subr.mxu0 0.0
        %839 = vmatpush1.msra.mxu0 0.0
        %840 = vmatprep.subr.mxu0 0.0
        %841 = vmatpush1.msra.mxu0 0.0
        %842 = vmatprep.subr.mxu0 0.0
        %843 = vmatpush1.msra.mxu0 0.0
        %844 = vmatprep.subr.mxu0 0.0
        %845 = vmatpush1.msra.mxu0 0.0
        %846 = vmatprep.subr.mxu0 0.0
        %847 = vmatpush1.msra.mxu0 0.0
        %848 = vmatprep.subr.mxu0 0.0
        %849 = vmatpush1.msra.mxu0 0.0
        %850 = vmatprep.subr.mxu0 0.0
        %851 = vmatpush1.msra.mxu0 0.0
        %852 = vmatprep.subr.mxu0 0.0
        %853 = vmatpush1.msra.mxu0 0.0
        %854 = vmatprep.subr.mxu0 0.0
        %855 = vmatpush1.msra.mxu0 0.0
        %856 = vmatprep.subr.mxu0 0.0
        %857 = vmatpush1.msra.mxu0 0.0
        %858 = vmatprep.subr.mxu0 0.0
        %859 = vmatpush1.msra.mxu0 0.0
        %860 = vmatprep.subr.mxu0 0.0
        %861 = vmatpush1.msra.mxu0 0.0
        %862 = vmatprep.subr.mxu0 0.0
        %863 = vmatpush1.msra.mxu0 0.0
        %864 = vmatprep.subr.mxu0 0.0
        %865 = vmatpush1.msra.mxu0 0.0
        %866 = vmatprep.subr.mxu0 0.0
        %867 = vmatpush1.msra.mxu0 0.0
        %868 = vmatprep.subr.mxu0 0.0
        %869 = vmatpush1.msra.mxu0 0.0
        %870 = vmatprep.subr.mxu0 0.0
        %871 = vmatpush1.msra.mxu0 0.0
        %872 = vmatprep.subr.mxu0 0.0
        %873 = vmatpush1.msra.mxu0 0.0
        %874 = vmatprep.subr.mxu0 0.0
        %875 = vmatpush1.msra.mxu0 0.0
        %876 = vmatprep.subr.mxu0 0.0
        %877 = vmatpush1.msra.mxu0 0.0
        %878 = vmatprep.subr.mxu0 0.0
        %879 = vmatpush1.msra.mxu0 0.0
        %880 = vmatprep.subr.mxu0 0.0
        %881 = vmatpush1.msra.mxu0 0.0
        %882 = vmatprep.subr.mxu0 0.0
        %883 = vmatpush1.msra.mxu0 0.0
        %884 = vmatprep.subr.mxu0 0.0
        %885 = vmatpush1.msra.mxu0 0.0
        %886 = vmatprep.subr.mxu0 0.0
        %887 = vmatpush1.msra.mxu0 0.0
        %888 = vmatprep.mubr.f32.mxu0 0.0
        %889 = vmatmul.mubr.f32.gmra.mrb[0].mxu0 %v822
        %v890 = vpop.f32.mrb[0].mxu0
        %v891 = vadd.f32 0.0, %v890
        %v892 = vpop.f32.mrb[0].mxu0
        %893 = vdwg.mxu0
        %895 = vrot.lane.b32.xlu0 %v891, 16
        %v896 = vpop.permute.xlu0 %895
        %vm898 = vcmask 195712
        %899 = vst.msk [vmem:[%s292] sm:$0xff] %vm898, %v896
        %s900 = scalar_lea.vmem %s299, 16 [#allocation9]
        %901 = vst.msk [vmem:[%s900] sm:$0xff] %vm391, %v817
        %902 = vrot.lane.b32.xlu0 %v387, 104
        %v903 = vpop.permute.xlu0 %902
        %904 = vrot.lane.b32.xlu0 %v383, 72
        %v905 = vpop.permute.xlu0 %904
        %v906 = vsel %vm391, %v903, 0
        %v908 = vsel %vm391, %v905, 0
        %910 = vmatprep.subr.mxu0 0.0
        %911 = vmatpush1.xpose.msra.mxu0 %v908
        %912 = vmatprep.subr.mxu0 0.0
        %913 = vmatpush1.xpose.msra.mxu0 0.0
        %914 = vmatprep.subr.mxu0 0.0
        %915 = vmatpush1.xpose.msra.mxu0 0.0
        %916 = vmatprep.subr.mxu0 0.0
        %917 = vmatpush1.xpose.msra.mxu0 0.0
        %918 = vmatprep.subr.mxu0 0.0
        %919 = vmatpush1.xpose.msra.mxu0 0.0
        %920 = vmatprep.subr.mxu0 0.0
        %921 = vmatpush1.xpose.msra.mxu0 0.0
        %922 = vmatprep.subr.mxu0 0.0
        %923 = vmatpush1.xpose.msra.mxu0 0.0
        %924 = vmatprep.subr.mxu0 0.0
        %925 = vmatpush1.xpose.msra.mxu0 0.0
        %926 = vmatprep.subr.mxu0 0.0
        %927 = vmatpush1.xpose.msra.mxu0 0.0
        %928 = vmatprep.subr.mxu0 0.0
        %929 = vmatpush1.xpose.msra.mxu0 0.0
        %930 = vmatprep.subr.mxu0 0.0
        %931 = vmatpush1.xpose.msra.mxu0 0.0
        %932 = vmatprep.subr.mxu0 0.0
        %933 = vmatpush1.xpose.msra.mxu0 0.0
        %934 = vmatprep.subr.mxu0 0.0
        %935 = vmatpush1.xpose.msra.mxu0 0.0
        %936 = vmatprep.subr.mxu0 0.0
        %937 = vmatpush1.xpose.msra.mxu0 0.0
        %938 = vmatprep.subr.mxu0 0.0
        %939 = vmatpush1.xpose.msra.mxu0 0.0
        %940 = vmatprep.subr.mxu0 0.0
        %941 = vmatpush1.xpose.msra.mxu0 0.0
        %942 = vmatprep.subr.mxu0 0.0
        %943 = vmatpush1.xpose.msra.mxu0 0.0
        %944 = vmatprep.subr.mxu0 0.0
        %945 = vmatpush1.xpose.msra.mxu0 0.0
        %946 = vmatprep.subr.mxu0 0.0
        %947 = vmatpush1.xpose.msra.mxu0 0.0
        %948 = vmatprep.subr.mxu0 0.0
        %949 = vmatpush1.xpose.msra.mxu0 0.0
        %950 = vmatprep.subr.mxu0 0.0
        %951 = vmatpush1.xpose.msra.mxu0 0.0
        %952 = vmatprep.subr.mxu0 0.0
        %953 = vmatpush1.xpose.msra.mxu0 0.0
        %954 = vmatprep.subr.mxu0 0.0
        %955 = vmatpush1.xpose.msra.mxu0 0.0
        %956 = vmatprep.subr.mxu0 0.0
        %957 = vmatpush1.xpose.msra.mxu0 0.0
        %958 = vmatprep.subr.mxu0 0.0
        %959 = vmatpush1.xpose.msra.mxu0 0.0
        %960 = vmatprep.subr.mxu0 0.0
        %961 = vmatpush1.xpose.msra.mxu0 0.0
        %962 = vmatprep.subr.mxu0 0.0
        %963 = vmatpush1.xpose.msra.mxu0 0.0
        %964 = vmatprep.subr.mxu0 0.0
        %965 = vmatpush1.xpose.msra.mxu0 0.0
        %966 = vmatprep.subr.mxu0 0.0
        %967 = vmatpush1.xpose.msra.mxu0 0.0
        %968 = vmatprep.subr.mxu0 0.0
        %969 = vmatpush1.xpose.msra.mxu0 0.0
        %970 = vmatprep.subr.mxu0 0.0
        %971 = vmatpush1.xpose.msra.mxu0 0.0
        %972 = vmatprep.subr.mxu0 0.0
        %973 = vmatpush1.xpose.msra.mxu0 0.0
        %974 = vmatprep.mubr.f32.mxu0 0.0
        %975 = vmatmul.mubr.f32.gmra.mrb[0].mxu0 %v906
        %v976 = vpop.f32.mrb[0].mxu0
        %v977 = vadd.f32 %v386, %v976
        %v978 = vpop.f32.mrb[0].mxu0
        %979 = vdwg.mxu0
        %v980 = vsel %vm391, %v977, -inf
        %981 = vmax.xlane.f32.xlu0 %v980
        %v982 = vpop.xlane.xlu0 %981
        %v983 = vsub.f32 %v977, %v982
        %v984 = vmul.f32 %v983, 1.442695
        %v985 = vpow.pop %v984
        %v986 = vsel %vm391, %v985, 0.0
        %987 = vadd.xlane.f32.xlu0 %v986
        %v988 = vpop.xlane.xlu0 %987
        %v989 = vrcp.pop %v988
        %v990 = vmul.f32 %v985, %v989
        %991 = vrot.lane.b32.xlu0 %v383, 40
        %v992 = vpop.permute.xlu0 %991
        %v995 = vsel %vm391, %v990, 0
        %997 = vmatprep.subr.mxu0 0.0
        %998 = vmatpush1.msra.mxu0 %v992
        %999 = vmatprep.subr.mxu0 0.0
        %1000 = vmatpush1.msra.mxu0 0.0
        %1001 = vmatprep.subr.mxu0 0.0
        %1002 = vmatpush1.msra.mxu0 0.0
        %1003 = vmatprep.subr.mxu0 0.0
        %1004 = vmatpush1.msra.mxu0 0.0
        %1005 = vmatprep.subr.mxu0 0.0
        %1006 = vmatpush1.msra.mxu0 0.0
        %1007 = vmatprep.subr.mxu0 0.0
        %1008 = vmatpush1.msra.mxu0 0.0
        %1009 = vmatprep.subr.mxu0 0.0
        %1010 = vmatpush1.msra.mxu0 0.0
        %1011 = vmatprep.subr.mxu0 0.0
        %1012 = vmatpush1.msra.mxu0 0.0
        %1013 = vmatprep.subr.mxu0 0.0
        %1014 = vmatpush1.msra.mxu0 0.0
        %1015 = vmatprep.subr.mxu0 0.0
        %1016 = vmatpush1.msra.mxu0 0.0
        %1017 = vmatprep.subr.mxu0 0.0
        %1018 = vmatpush1.msra.mxu0 0.0
        %1019 = vmatprep.subr.mxu0 0.0
        %1020 = vmatpush1.msra.mxu0 0.0
        %1021 = vmatprep.subr.mxu0 0.0
        %1022 = vmatpush1.msra.mxu0 0.0
        %1023 = vmatprep.subr.mxu0 0.0
        %1024 = vmatpush1.msra.mxu0 0.0
        %1025 = vmatprep.subr.mxu0 0.0
        %1026 = vmatpush1.msra.mxu0 0.0
        %1027 = vmatprep.subr.mxu0 0.0
        %1028 = vmatpush1.msra.mxu0 0.0
        %1029 = vmatprep.subr.mxu0 0.0
        %1030 = vmatpush1.msra.mxu0 0.0
        %1031 = vmatprep.subr.mxu0 0.0
        %1032 = vmatpush1.msra.mxu0 0.0
        %1033 = vmatprep.subr.mxu0 0.0
        %1034 = vmatpush1.msra.mxu0 0.0
        %1035 = vmatprep.subr.mxu0 0.0
        %1036 = vmatpush1.msra.mxu0 0.0
        %1037 = vmatprep.subr.mxu0 0.0
        %1038 = vmatpush1.msra.mxu0 0.0
        %1039 = vmatprep.subr.mxu0 0.0
        %1040 = vmatpush1.msra.mxu0 0.0
        %1041 = vmatprep.subr.mxu0 0.0
        %1042 = vmatpush1.msra.mxu0 0.0
        %1043 = vmatprep.subr.mxu0 0.0
        %1044 = vmatpush1.msra.mxu0 0.0
        %1045 = vmatprep.subr.mxu0 0.0
        %1046 = vmatpush1.msra.mxu0 0.0
        %1047 = vmatprep.subr.mxu0 0.0
        %1048 = vmatpush1.msra.mxu0 0.0
        %1049 = vmatprep.subr.mxu0 0.0
        %1050 = vmatpush1.msra.mxu0 0.0
        %1051 = vmatprep.subr.mxu0 0.0
        %1052 = vmatpush1.msra.mxu0 0.0
        %1053 = vmatprep.subr.mxu0 0.0
        %1054 = vmatpush1.msra.mxu0 0.0
        %1055 = vmatprep.subr.mxu0 0.0
        %1056 = vmatpush1.msra.mxu0 0.0
        %1057 = vmatprep.subr.mxu0 0.0
        %1058 = vmatpush1.msra.mxu0 0.0
        %1059 = vmatprep.subr.mxu0 0.0
        %1060 = vmatpush1.msra.mxu0 0.0
        %1061 = vmatprep.mubr.f32.mxu0 0.0
        %1062 = vmatmul.mubr.f32.gmra.mrb[0].mxu0 %v995
        %v1063 = vpop.f32.mrb[0].mxu0
        %v1064 = vadd.f32 0.0, %v1063
        %v1065 = vpop.f32.mrb[0].mxu0
        %1066 = vdwg.mxu0
        %1068 = vrot.lane.b32.xlu0 %v1064, 24
        %v1069 = vpop.permute.xlu0 %1068
        %vm1071 = vcmask 261312
        %1072 = vst.msk [vmem:[%s292] sm:$0xff] %vm1071, %v1069
        %s1073 = scalar_lea.vmem %s299, 24 [#allocation9]
        %1074 = vst.msk [vmem:[%s1073] sm:$0xff] %vm391, %v990
        %s1075 = sand.u32 %s129, 1
        %s1076 = scalar_lea.sflag [#allocation4], %s1075
        %s1077 = sand.u32 %s129, 1
        %s1078 = smul.addr %s1077, 8
        %s1079 = scalar_lea.vmem [#allocation8], %s1078
        %s1080 = sand.u32 %s155, 1
        %s1081 = scalar_lea.sflag [#allocation10], %s1080
        %s1082 = sand.u32 %s155, 1
        %s1083 = smul.addr %s1082, 32
        %s1084 = scalar_lea.vmem [#allocation9], %s1083
        // Predicated region
        $region49: #{tpu_custom_call.1} parent=35 // pred_check
          %p1085 = pneg %p139
        $region50: #{tpu_custom_call.1} parent=35 // pred_check_branch
          %1087 = sbr.rel (%p1085) target = $region52
        $region51: #{tpu_custom_call.1} parent=35 // pred_region
          %s1089 = ssub.s32 128, 128
          %1090 = vsyncadd %s1076, %s1089
          %s1091 = smul.addr %s27, 128
          %s1092 = scalar_lea.hbm %s4, %s1091
          %s1094 = sshll.u32 %s1079, 4
          %s1095 = int_to_ptr.vmem [resolvable:$true] %s1094
          %1097 = dma.vmem_to_hbm [thread:$0]  %s1095, 128, %s1092, %s1076
        $region52: #{tpu_custom_call.1} parent=35 // pred_fallthru
          _
        // Predicated region
        $region53: #{tpu_custom_call.1} parent=35 // pred_check
          %p1098 = pneg %p165
        $region54: #{tpu_custom_call.1} parent=35 // pred_check_branch
          %1100 = sbr.rel (%p1098) target = $region56
        $region55: #{tpu_custom_call.1} parent=35 // pred_region
          %s1102 = ssub.s32 512, 512
          %1103 = vsyncadd %s1081, %s1102
          %s1104 = smul.addr %s27, 4
          %s1105 = smul.addr %s1104, 128
          %s1106 = scalar_lea.hbm %s5, %s1105
          %s1107 = sshll.u32 %s1084, 4
          %s1108 = int_to_ptr.vmem [resolvable:$true] %s1107
          %1113 = dma.vmem_to_hbm [thread:$0]  %s1108, 512, %s1106, %s1081, 128, 128, 8
        $region56: #{tpu_custom_call.1} parent=35 // pred_fallthru
          _
      $region36: #{tpu_custom_call.1} parent=5 // pred_fallthru
        _
      %p1114 = scmp.le.s32.totalorder 2, %s22
      // Predicated region
      $region57: #{tpu_custom_call.1} parent=5 // pred_check
        %p1115 = pneg %p1114
      $region58: #{tpu_custom_call.1} parent=5 // pred_check_branch
        %1117 = sbr.rel (%p1115) target = $region60
      $region59: #{tpu_custom_call.1} parent=5 // pred_region
        %s1118 = ssub.s32 %s22, 2
        // Predicated region
        $region61: #{tpu_custom_call.1} parent=59 // pred_check
          %p1119 = pneg %p145
        $region62: #{tpu_custom_call.1} parent=59 // pred_check_branch
          %1121 = sbr.rel (%p1119) target = $region64
        $region63: #{tpu_custom_call.1} parent=59 // pred_region
          %s1122 = sand.u32 %s130, 1
          %s1123 = scalar_lea.sflag [#allocation4], %s1122
          %s1124 = sand.u32 %s130, 1
          %s1125 = smul.addr %s1124, 8
          %s1126 = scalar_lea.vmem [#allocation8], %s1125
          %1127 = dma.done %s1123, 128
        $region64: #{tpu_custom_call.1} parent=59 // pred_fallthru
          _
        // Predicated region
        $region65: #{tpu_custom_call.1} parent=59 // pred_check
          %p1128 = pneg %p171
        $region66: #{tpu_custom_call.1} parent=59 // pred_check_branch
          %1130 = sbr.rel (%p1128) target = $region68
        $region67: #{tpu_custom_call.1} parent=59 // pred_region
          %s1131 = sand.u32 %s156, 1
          %s1132 = scalar_lea.sflag [#allocation10], %s1131
          %s1133 = sand.u32 %s156, 1
          %s1134 = smul.addr %s1133, 32
          %s1135 = scalar_lea.vmem [#allocation9], %s1134
          %1136 = dma.done %s1132, 512
        $region68: #{tpu_custom_call.1} parent=59 // pred_fallthru
          _
      $region60: #{tpu_custom_call.1} parent=5 // pred_fallthru
        _
    $region6: #{tpu_custom_call.1} parent=1 // loop_footer
      %s26 = sadd.s32 1, %s22
    $region7: #{tpu_custom_call.1} parent=1 // loop_footer_branch
      %21 = sbr.rel target = $region3
    $region8: #{tpu_custom_call.1} parent=1 // loop_exit
      _
    %1137 = vsyncpa [#allocation3], 1
    %s1138 = scalar_lea.sflag [#allocation3], 1
    %1139 = vsyncpa %s1138, 1
    %1140 = vsyncpa [#allocation6], 1
    %1141 = vsyncpa [#allocation4], 1
    %s1142 = scalar_lea.sflag [#allocation4], 1
    %1143 = vsyncpa %s1142, 1
    %1144 = vsyncpa [#allocation10], 1
    %s1145 = scalar_lea.sflag [#allocation10], 1
    %1146 = vsyncpa %s1145, 1

</llo_original>
